<compile_context>
chip_gen: v7x
topology: tpu7x:2x2x1
jax: 0.10.0
libtpu: 0.0.40
codegen_flags: <defaults>
</compile_context>

<pallas_src>
import functools

import jax
import jax.numpy as jnp
from jax.experimental import pallas as pl
from jax.experimental.pallas import tpu as pltpu


def _ceil_div(a, b):
    return -(-a // b)


def _cparams(sem):
    cp = getattr(pltpu, "CompilerParams", None) or getattr(pltpu, "TPUCompilerParams", None)
    return None if cp is None else cp(dimension_semantics=sem)


def _approx_reciprocal(x):
    if hasattr(pl, "reciprocal"):
        return pl.reciprocal(x, approx=True)   # EUP slot, off the VALU critical path
    return 1.0 / x


# ---------------------------------------------------------------------------
# Kernel 1: fused 1x1-conv projection + adaptive max pool
# ---------------------------------------------------------------------------
def proj_pool_kernel(x_ref, w_ref, b_ref, o_ref, *, width, row_windows, col_windows):
    """x_ref: (1, rows*width, Cin) bf16 (flattened NHWC rows for this block)
    w_ref: (Cin, ec) bf16   b_ref: (1, ec) f32
    o_ref: (1, len(row_windows), len(col_windows), ec) f32

    row_windows / col_windows are static (h0, h1)/(w0, w1) adaptive-pool bounds,
    relative to the block.  Projection is done band-by-band so only one band of
    the f32 projected activation is ever live.
    """
    ec = w_ref.shape[1]
    for i, (h0, h1) in enumerate(row_windows):
        xb = x_ref[h0 * width:(h1 * width), :]                     # (dh*W, Cin) bf16
        y = jnp.dot(xb, w_ref[...], preferred_element_type=jnp.float32)
        y = y.reshape(h1 - h0, width, ec)                          # (dh, W, ec) f32
        row_max = jnp.max(y, axis=0)                               # (W, ec)
        for j, (w0, w1) in enumerate(col_windows):
            cell = jnp.max(row_max[w0:w1, :], axis=0, keepdims=True)   # (1, ec)
            # bias after the max pool (exact) + direct lane-dense row store
            o_ref[0, i, j:j + 1, :] = cell + b_ref[...]


def proj_pool_kernel_entry(x_ref, w_ref, b_ref, o_ref, **kw):
    # x_ref block is (1, rows*width, Cin); drop the leading batch dim via a view.
    proj_pool_kernel(x_ref.at[0], w_ref, b_ref, o_ref, **kw)


# ---------------------------------------------------------------------------
# Kernel 2: fused LayerNorm + QKV + multi-head attention + proj + residual
# ---------------------------------------------------------------------------
def attn_kernel(text_ref, feat_ref,
                qg_ref, qbln_ref, wq_ref, bq_ref,
                kg_ref, kbln_ref, wk_ref, bk_ref,
                vg_ref, vbln_ref, wv_ref, bv_ref,
                wp_ref, bp_ref,
                o_ref, head_buf, *, nh):
    """text_ref: (Bt, nt, ct) f32   feat_ref: (Bt, np, ec) f32   o_ref: (Bt, nt, ct) f32
    head_buf: VMEM scratch (Bt*nt, ec) f32.  Weight matrices arrive in bf16."""
    bt, nt, ct = text_ref.shape
    _, npt, ec = feat_ref.shape
    hc = ec // nh
    inv_scale = 1.0 / (hc ** 0.5)

    t = text_ref[...].reshape(bt * nt, ct)       # f32
    f = feat_ref[...].reshape(bt * npt, ec)      # f32

    def ln_norm(x):
        mu = jnp.mean(x, axis=-1, keepdims=True)
        var = jnp.mean(jnp.square(x - mu), axis=-1, keepdims=True)
        return (x - mu) * jax.lax.rsqrt(var + 1e-5)

    tq = ln_norm(t) * qg_ref[...] + qbln_ref[...]
    fn = ln_norm(f)                              # shared LN stats for K and V
    fk = fn * kg_ref[...] + kbln_ref[...]
    fv = fn * vg_ref[...] + vbln_ref[...]

    q = jnp.dot(tq.astype(jnp.bfloat16), wq_ref[...],
                preferred_element_type=jnp.float32) + bq_ref[...]
    kx = jnp.dot(fk.astype(jnp.bfloat16), wk_ref[...],
                 preferred_element_type=jnp.float32) + bk_ref[...]
    vx = jnp.dot(fv.astype(jnp.bfloat16), wv_ref[...],
                 preferred_element_type=jnp.float32) + bv_ref[...]

    qb = (q * inv_scale).astype(jnp.bfloat16)    # fold 1/sqrt(hc) into q once
    kb = kx.astype(jnp.bfloat16)
    vb = vx.astype(jnp.bfloat16)

    # Static (batch, head) loop; heads are contiguous hc-wide channel slices
    # (matches torch reshape(bs, -1, nh, hc)).  Per-head results go to VMEM
    # scratch; a single ec->ct projection follows the loop.
    for b in range(bt):
        rs = slice(b * nt, (b + 1) * nt)
        ps = slice(b * npt, (b + 1) * npt)
        for m in range(nh):
            cs = slice(m * hc, (m + 1) * hc)
            qh = qb[rs, cs]                      # (nt, hc) bf16
            kh = kb[ps, cs]                      # (np, hc) bf16
            vh = vb[ps, cs]                      # (np, hc) bf16
            s = jax.lax.dot_general(qh, kh, (((1,), (1,)), ((), ())),
                                    preferred_element_type=jnp.float32)
            s = s - jnp.max(s, axis=-1, keepdims=True)
            p = jnp.exp(s)
            p = p * _approx_reciprocal(jnp.sum(p, axis=-1, keepdims=True))
            oh = jnp.dot(p.astype(jnp.bfloat16), vh,
                         preferred_element_type=jnp.float32)      # (nt, hc)
            head_buf[rs, cs] = oh

    out = jnp.dot(head_buf[...].astype(jnp.bfloat16), wp_ref[...],
                  preferred_element_type=jnp.float32) + bp_ref[...]
    # scale=False (module default) => multiplier 1.0; add the residual text.
    o_ref[...] = (out + t).reshape(bt, nt, ct)


# ---------------------------------------------------------------------------
# Wrapper
# ---------------------------------------------------------------------------
def _pick_b_tile(bs):
    if bs <= 1:
        return 1
    # Largest divisor of bs that still leaves >= 2 grid steps: amortizes per-step
    # overhead / fills the MXU M dim while keeping both v7x TensorCores busy.
    for d in range(bs // 2, 0, -1):
        if bs % d == 0:
            return d
    return 1


def image_pooling_attn_forward(xs, text, params, *, nh, k, b_tile=None):
    bs = xs[0].shape[0]
    ec = params["q_w"].shape[1]
    ct = text.shape[-1]
    nt = text.shape[1]
    bf16 = jnp.bfloat16

    pooled = []
    for x_nchw, w, b in zip(xs, params["proj_w"], params["proj_b"]):
        N, Ci, H, W = x_nchw.shape
        # Fuse NCHW->NHWC transpose, (H,W) flatten and bf16 downcast in one pass.
        x = jnp.transpose(x_nchw, (0, 2, 3, 1)).reshape(N, H * W, Ci).astype(bf16)
        w_bf = w.astype(bf16)
        col_windows = tuple(((c * W) // k, _ceil_div((c + 1) * W, k)) for c in range(k))

        banded = (H % k == 0) and (((H // k) * W) % 8 == 0)
        if banded:
            # Row bands are uniform & disjoint -> tile them on the grid: each step
            # only holds ~1/k of the image plus one band of the f32 projection.
            hb = H // k
            kern = functools.partial(proj_pool_kernel_entry, width=W,
                                     row_windows=((0, hb),), col_windows=col_windows)
            out = pl.pallas_call(
                kern,
                out_shape=jax.ShapeDtypeStruct((N, k, k, ec), jnp.float32),
                grid=(N, k),
                in_specs=[
                    pl.BlockSpec((1, hb * W, Ci), lambda n, a: (n, a, 0)),
                    pl.BlockSpec((Ci, ec), lambda n, a: (0, 0)),
                    pl.BlockSpec((1, ec), lambda n, a: (0, 0)),
                ],
                out_specs=pl.BlockSpec((1, 1, k, ec), lambda n, a: (n, a, 0, 0)),
                compiler_params=_cparams(("parallel", "parallel")),
            )(x, w_bf, b)
        else:
            # Non-uniform / overlapping adaptive windows: whole image per step, but
            # the projection is still computed band-by-band inside the kernel.
            row_windows = tuple(((a * H) // k, _ceil_div((a + 1) * H, k)) for a in range(k))
            kern = functools.partial(proj_pool_kernel_entry, width=W,
                                     row_windows=row_windows, col_windows=col_windows)
            out = pl.pallas_call(
                kern,
                out_shape=jax.ShapeDtypeStruct((N, k, k, ec), jnp.float32),
                grid=(N,),
                in_specs=[
                    pl.BlockSpec((1, H * W, Ci), lambda n: (n, 0, 0)),
                    pl.BlockSpec((Ci, ec), lambda n: (0, 0)),
                    pl.BlockSpec((1, ec), lambda n: (0, 0)),
                ],
                out_specs=pl.BlockSpec((1, k, k, ec), lambda n: (n, 0, 0, 0)),
                compiler_params=_cparams(("parallel",)),
            )(x, w_bf, b)
        pooled.append(out.reshape(N, k * k, ec))

    # Patch ordering matches torch: level-major, then row-major (k, k) flatten.
    feats = jnp.concatenate(pooled, axis=1)          # (bs, nf*k*k, ec) f32
    np_tot = feats.shape[1]

    bt = b_tile if b_tile is not None else _pick_b_tile(bs)
    assert bs % bt == 0

    wspec = lambda shape: pl.BlockSpec(shape, lambda i: (0, 0))
    out = pl.pallas_call(
        functools.partial(attn_kernel, nh=nh),
        out_shape=jax.ShapeDtypeStruct((bs, nt, ct), jnp.float32),
        grid=(bs // bt,),
        in_specs=[
            pl.BlockSpec((bt, nt, ct), lambda i: (i, 0, 0)),
            pl.BlockSpec((bt, np_tot, ec), lambda i: (i, 0, 0)),
            wspec((1, ct)), wspec((1, ct)), wspec((ct, ec)), wspec((1, ec)),
            wspec((1, ec)), wspec((1, ec)), wspec((ec, ec)), wspec((1, ec)),
            wspec((1, ec)), wspec((1, ec)), wspec((ec, ec)), wspec((1, ec)),
            wspec((ec, ct)), wspec((1, ct)),
        ],
        out_specs=pl.BlockSpec((bt, nt, ct), lambda i: (i, 0, 0)),
        scratch_shapes=[pltpu.VMEM((bt * nt, ec), jnp.float32)],
        compiler_params=_cparams(("parallel",)),
    )(text.astype(jnp.float32), feats,
      params["q_ln_g"], params["q_ln_b"], params["q_w"].astype(bf16), params["q_b"],
      params["k_ln_g"], params["k_ln_b"], params["k_w"].astype(bf16), params["k_b"],
      params["v_ln_g"], params["v_ln_b"], params["v_w"].astype(bf16), params["v_b"],
      params["p_w"].astype(bf16), params["p_b"])
    return out


# ---------------------------------------------------------------------------
# Deterministic parameter construction
# ---------------------------------------------------------------------------
def init_params(key, ch, ec, ct):
    n_keys = 2 * len(ch) + 14
    keys = iter(jax.random.split(key, n_keys))
    nxt = lambda: next(keys)

    proj_w, proj_b = [], []
    for c in ch:
        proj_w.append(jax.random.normal(nxt(), (c, ec), jnp.float32) / jnp.sqrt(c))
        proj_b.append(0.1 * jax.random.normal(nxt(), (1, ec), jnp.float32))

    def ln_affine(dim):
        g = 1.0 + 0.1 * jax.random.normal(nxt(), (1, dim), jnp.float32)
        b = 0.1 * jax.random.normal(nxt(), (1, dim), jnp.float32)
        return g, b

    def lin(din, dout):
        w = jax.random.normal(nxt(), (din, dout), jnp.float32) / jnp.sqrt(din)
        b = 0.1 * jax.random.normal(nxt(), (1, dout), jnp.float32)
        return w, b

    q_g, q_bln = ln_affine(ct); q_w, q_b = lin(ct, ec)
    k_g, k_bln = ln_affine(ec); k_w, k_b = lin(ec, ec)
    v_g, v_bln = ln_affine(ec); v_w, v_b = lin(ec, ec)
    p_w, p_b = lin(ec, ct)

    return dict(proj_w=proj_w, proj_b=proj_b,
                q_ln_g=q_g, q_ln_b=q_bln, q_w=q_w, q_b=q_b,
                k_ln_g=k_g, k_ln_b=k_bln, k_w=k_w, k_b=k_b,
                v_ln_g=v_g, v_ln_b=v_bln, v_w=v_w, v_b=v_b,
                p_w=p_w, p_b=p_b)


# ---------------------------------------------------------------------------
# Pure-JAX reference.  matmul_dtype=jnp.float32 -> torch-faithful f32/HIGHEST;
# matmul_dtype=jnp.bfloat16 -> mirrors the kernels' bf16 MXU inputs / f32 accum.
# ---------------------------------------------------------------------------
def ref_forward(xs, text, params, *, nh, k, matmul_dtype=jnp.float32):
    hp = jax.lax.Precision.HIGHEST
    md = matmul_dtype
    ec = params["q_w"].shape[1]
    hc = ec // nh

    def mm(eq, a, b):
        return jnp.einsum(eq, a.astype(md).astype(jnp.float32),
                          b.astype(md).astype(jnp.float32), precision=hp)

    pooled = []
    for x_nchw, w, b in zip(xs, params["proj_w"], params["proj_b"]):
        x = jnp.transpose(x_nchw, (0, 2, 3, 1))
        y = mm("nhwi,io->nhwo", x, w)
        N, H, W, _ = y.shape
        cells = []
        for a in range(k):
            h0, h1 = (a * H) // k, _ceil_div((a + 1) * H, k)
            for c in range(k):
                w0, w1 = (c * W) // k, _ceil_div((c + 1) * W, k)
                cells.append(jnp.max(y[:, h0:h1, w0:w1, :], axis=(1, 2)))
        pooled.append(jnp.stack(cells, axis=1) + b.reshape(1, 1, -1))
    feats = jnp.concatenate(pooled, axis=1)

    def ln(x, g, bb):
        mu = jnp.mean(x, axis=-1, keepdims=True)
        var = jnp.mean(jnp.square(x - mu), axis=-1, keepdims=True)
        return (x - mu) / jnp.sqrt(var + 1e-5) * g.reshape(1, 1, -1) + bb.reshape(1, 1, -1)

    text_f = text.astype(jnp.float32)
    q = mm("bnc,ce->bne", ln(text_f, params["q_ln_g"], params["q_ln_b"]),
           params["q_w"]) + params["q_b"].reshape(1, 1, -1)
    kx = mm("bpc,ce->bpe", ln(feats, params["k_ln_g"], params["k_ln_b"]),
            params["k_w"]) + params["k_b"].reshape(1, 1, -1)
    vx = mm("bpc,ce->bpe", ln(feats, params["v_ln_g"], params["v_ln_b"]),
            params["v_w"]) + params["v_b"].reshape(1, 1, -1)

    bs, nt, _ = q.shape
    npt = kx.shape[1]
    q = (q / (hc ** 0.5)).reshape(bs, nt, nh, hc)
    kx = kx.reshape(bs, npt, nh, hc)
    vx = vx.reshape(bs, npt, nh, hc)
    aw = mm("bnmc,bkmc->bmnk", q, kx)
    aw = jax.nn.softmax(aw, axis=-1)
    out = mm("bmnk,bkmc->bnmc", aw, vx).reshape(bs, nt, ec)
    out = mm("bne,ec->bnc", out, params["p_w"]) + params["p_b"].reshape(1, 1, -1)
    return out * 1.0 + text_f     # scale=False => 1.0


if __name__ == "__main__":
    key = jax.random.PRNGKey(0)
    k_x0, k_x1, k_t, k_p = jax.random.split(key, 4)

    BS = 2
    CH = (16, 32)          # two feature-pyramid levels
    EC, CT, NH, K = 32, 64, 4, 3
    NT = 8                 # number of text tokens

    # Level 0 exercises the row-band-tiled fast path (12 % 3 == 0);
    # level 1 exercises the general adaptive-window path (16 % 3 != 0).
    x0 = jax.random.normal(k_x0, (BS, CH[0], 12, 12), jnp.float32)   # NCHW
    x1 = jax.random.normal(k_x1, (BS, CH[1], 16, 8), jnp.float32)    # NCHW
    text = jax.random.normal(k_t, (BS, NT, CT), jnp.float32)
    params = init_params(k_p, CH, EC, CT)

    out = image_pooling_attn_forward([x0, x1], text, params, nh=NH, k=K)
    out = jax.block_until_ready(out)
    assert out.shape == (BS, NT, CT)

    # Mirrors the kernels' bf16 matmul inputs / f32 accumulation -> tight check.
    ref_bf16 = ref_forward([x0, x1], text, params, nh=NH, k=K, matmul_dtype=jnp.bfloat16)
    err_bf16 = float(jnp.max(jnp.abs(out - ref_bf16)))
    assert jnp.allclose(out, ref_bf16, atol=3e-2, rtol=3e-2), \
        f"mismatch vs bf16-matmul reference: {err_bf16}"

    # Torch-faithful f32 reference -> coarse sanity bound (bf16 rounding allowed).
    ref_f32 = ref_forward([x0, x1], text, params, nh=NH, k=K, matmul_dtype=jnp.float32)
    err_f32 = float(jnp.max(jnp.abs(out - ref_f32)))
    assert jnp.allclose(out, ref_f32, atol=0.3, rtol=0.1), \
        f"mismatch vs f32 reference: {err_f32}"

    print("KERNEL_OK")
</pallas_src>

<mosaic_0001>
module attributes {stable_mosaic.version = 11 : i64} {
  func.func @proj_pool_kernel_entry(%arg0: i32, %arg1: i32, %arg2: memref<1x48x16xbf16, #tpu.memory_space<vmem>>, %arg3: memref<16x32xbf16, #tpu.memory_space<vmem>>, %arg4: memref<1x32xf32, #tpu.memory_space<vmem>>, %arg5: memref<1x1x3x32xf32, #tpu.memory_space<vmem>>) attributes {dimension_semantics = [#tpu.dimension_semantics<parallel>, #tpu.dimension_semantics<parallel>], iteration_bounds = array<i64: 2, 3>, scalar_prefetch = 0 : i64, scratch_operands = 0 : i64, tpu.core_type = #tpu.core_type<tc>, window_params = [{transform_indices = @transform_0, window_bounds = array<i64: 1, 48, 16>}, {pipeline_mode = #tpu.pipeline_mode<synchronous>, transform_indices = @transform_1, window_bounds = array<i64: 16, 32>}, {pipeline_mode = #tpu.pipeline_mode<synchronous>, transform_indices = @transform_2, window_bounds = array<i64: 1, 32>}, {transform_indices = @transform_3, window_bounds = array<i64: 1, 1, 3, 32>}]} {
    %c0_i32 = arith.constant 0 : i32
    %c0_i32_0 = arith.constant 0 : i32
    %c0_i32_1 = arith.constant 0 : i32
    %0 = tpu.memref_slice %arg2[%c0_i32, %c0_i32_0, %c0_i32_1] : memref<1x48x16xbf16, #tpu.memory_space<vmem>> -> memref<1x48x16xbf16, #tpu.memory_space<vmem>>
    %1 = tpu.memref_squeeze %0 : memref<1x48x16xbf16, #tpu.memory_space<vmem>> -> memref<48x16xbf16, #tpu.memory_space<vmem>>
    %c0 = arith.constant 0 : index
    %c0_2 = arith.constant 0 : index
    %2 = vector.load %1[%c0, %c0_2] : memref<48x16xbf16, #tpu.memory_space<vmem>>, vector<48x16xbf16>
    %c0_3 = arith.constant 0 : index
    %c0_4 = arith.constant 0 : index
    %3 = vector.load %arg3[%c0_3, %c0_4] : memref<16x32xbf16, #tpu.memory_space<vmem>>, vector<16x32xbf16>
    %cst = arith.constant dense<0.000000e+00> : vector<48x32xf32>
    %4 = tpu.matmul %2, %3, %cst {dimension_numbers = #tpu.dot_dimension_numbers<[1], [0], [0], [1], [0, 0, 1, 1], [], []>} : vector<48x16xbf16>, vector<16x32xbf16>, vector<48x32xf32> -> vector<48x32xf32>
    %5 = vector.shape_cast %4 : vector<48x32xf32> to vector<4x12x32xf32>
    %cst_5 = arith.constant dense<0xFF800000> : vector<12x32xf32>
    %6 = vector.multi_reduction <maximumf>, %5, %cst_5 [0] : vector<4x12x32xf32> to vector<12x32xf32>
    %7 = vector.extract_strided_slice %6 {offsets = [0, 0], sizes = [4, 32], strides = [1, 1]} : vector<12x32xf32> to vector<4x32xf32>
    %cst_6 = arith.constant dense<0xFF800000> : vector<32xf32>
    %8 = vector.multi_reduction <maximumf>, %7, %cst_6 [0] : vector<4x32xf32> to vector<32xf32>
    %9 = vector.shape_cast %8 : vector<32xf32> to vector<1x32xf32>
    %c0_7 = arith.constant 0 : index
    %c0_8 = arith.constant 0 : index
    %10 = vector.load %arg4[%c0_7, %c0_8] : memref<1x32xf32, #tpu.memory_space<vmem>>, vector<1x32xf32>
    %11 = arith.addf %9, %10 : vector<1x32xf32>
    %c0_9 = arith.constant 0 : index
    %c0_10 = arith.constant 0 : index
    %c0_11 = arith.constant 0 : index
    %c0_12 = arith.constant 0 : index
    %12 = vector.load %arg5[%c0_9, %c0_10, %c0_11, %c0_12] : memref<1x1x3x32xf32, #tpu.memory_space<vmem>>, vector<1x1x1x32xf32>
    %13 = vector.shape_cast %12 : vector<1x1x1x32xf32> to vector<1x32xf32>
    %14 = vector.shape_cast %11 : vector<1x32xf32> to vector<1x1x1x32xf32>
    tpu.vector_store %arg5[%c0_9, %c0_10, %c0_11, %c0_12], %14 {strides = array<i32>} : memref<1x1x3x32xf32, #tpu.memory_space<vmem>>, vector<1x1x1x32xf32>,
    %15 = vector.extract_strided_slice %6 {offsets = [4, 0], sizes = [4, 32], strides = [1, 1]} : vector<12x32xf32> to vector<4x32xf32>
    %cst_13 = arith.constant dense<0xFF800000> : vector<32xf32>
    %16 = vector.multi_reduction <maximumf>, %15, %cst_13 [0] : vector<4x32xf32> to vector<32xf32>
    %17 = vector.shape_cast %16 : vector<32xf32> to vector<1x32xf32>
    %c0_14 = arith.constant 0 : index
    %c0_15 = arith.constant 0 : index
    %18 = vector.load %arg4[%c0_14, %c0_15] : memref<1x32xf32, #tpu.memory_space<vmem>>, vector<1x32xf32>
    %19 = arith.addf %17, %18 : vector<1x32xf32>
    %c0_16 = arith.constant 0 : index
    %c0_17 = arith.constant 0 : index
    %c1 = arith.constant 1 : index
    %c0_18 = arith.constant 0 : index
    %20 = vector.load %arg5[%c0_16, %c0_17, %c1, %c0_18] : memref<1x1x3x32xf32, #tpu.memory_space<vmem>>, vector<1x1x1x32xf32>
    %21 = vector.shape_cast %20 : vector<1x1x1x32xf32> to vector<1x32xf32>
    %22 = vector.shape_cast %19 : vector<1x32xf32> to vector<1x1x1x32xf32>
    tpu.vector_store %arg5[%c0_16, %c0_17, %c1, %c0_18], %22 {strides = array<i32>} : memref<1x1x3x32xf32, #tpu.memory_space<vmem>>, vector<1x1x1x32xf32>,
    %23 = vector.extract_strided_slice %6 {offsets = [8, 0], sizes = [4, 32], strides = [1, 1]} : vector<12x32xf32> to vector<4x32xf32>
    %cst_19 = arith.constant dense<0xFF800000> : vector<32xf32>
    %24 = vector.multi_reduction <maximumf>, %23, %cst_19 [0] : vector<4x32xf32> to vector<32xf32>
    %25 = vector.shape_cast %24 : vector<32xf32> to vector<1x32xf32>
    %c0_20 = arith.constant 0 : index
    %c0_21 = arith.constant 0 : index
    %26 = vector.load %arg4[%c0_20, %c0_21] : memref<1x32xf32, #tpu.memory_space<vmem>>, vector<1x32xf32>
    %27 = arith.addf %25, %26 : vector<1x32xf32>
    %c0_22 = arith.constant 0 : index
    %c0_23 = arith.constant 0 : index
    %c2 = arith.constant 2 : index
    %c0_24 = arith.constant 0 : index
    %28 = vector.load %arg5[%c0_22, %c0_23, %c2, %c0_24] : memref<1x1x3x32xf32, #tpu.memory_space<vmem>>, vector<1x1x1x32xf32>
    %29 = vector.shape_cast %28 : vector<1x1x1x32xf32> to vector<1x32xf32>
    %30 = vector.shape_cast %27 : vector<1x32xf32> to vector<1x1x1x32xf32>
    tpu.vector_store %arg5[%c0_22, %c0_23, %c2, %c0_24], %30 {strides = array<i32>} : memref<1x1x3x32xf32, #tpu.memory_space<vmem>>, vector<1x1x1x32xf32>,
    return
  }
  func.func @transform_0(%arg0: i32, %arg1: i32) -> (i32, i32, i32) {
    %c0_i32 = arith.constant 0 : i32
    %c0_i32_0 = arith.constant 0 : i32
    return %arg0, %arg1, %c0_i32 : i32, i32, i32
  }
  func.func @transform_1(%arg0: i32, %arg1: i32) -> (i32, i32) {
    %c0_i32 = arith.constant 0 : i32
    %c0_i32_0 = arith.constant 0 : i32
    %c0_i32_1 = arith.constant 0 : i32
    return %c0_i32, %c0_i32_0 : i32, i32
  }
  func.func @transform_2(%arg0: i32, %arg1: i32) -> (i32, i32) {
    %c0_i32 = arith.constant 0 : i32
    %c0_i32_0 = arith.constant 0 : i32
    %c0_i32_1 = arith.constant 0 : i32
    return %c0_i32, %c0_i32_0 : i32, i32
  }
  func.func @transform_3(%arg0: i32, %arg1: i32) -> (i32, i32, i32, i32) {
    %c0_i32 = arith.constant 0 : i32
    %c0_i32_0 = arith.constant 0 : i32
    %c0_i32_1 = arith.constant 0 : i32
    return %arg0, %arg1, %c0_i32, %c0_i32_0 : i32, i32, i32, i32
  }
}

</mosaic_0001>

<llo_original>
// kernel: tpu_custom_call.1
$region0: #{tpu_custom_call.1}
  #allocation0 [shape = 'u32[]', space=smem, size = 0x4, offset = 0x4, fixed_abs, tag = 'smem constant byte address 0x4 - core index']
  #allocation1 [shape = 'u32[144,128]{1,0:T(1,128)}', space=vmem, size = 0x12000, scoped, tag = 'internal scratch']
  %s0 = inlined_call_operand.vmem [shape: bf16[2,144,16], index: 0, kind: input, shape index: {}]
  %s1 = inlined_call_operand.vmem [shape: bf16[16,32], index: 1, kind: input, shape index: {}]
  %s2 = inlined_call_operand.vmem [shape: f32[1,32], index: 2, kind: input, shape index: {}]
  %s3 = inlined_call_operand.vmem [shape: f32[2,3,3,32], index: 3, kind: output, shape index: {}]
  %s4 = sld [smem:[#allocation0]]
  $region45: #{tpu_custom_call.1} parent=0
    _
  %s6 = ssub.s32 1, %s4
  %s7 = scalar_select 0, %s6, %s4
  loop: start=0, step=1, limit=8
  $region2: #{tpu_custom_call.1} parent=0 // loop_pre_header
    _
  $region3: #{tpu_custom_call.1} parent=0 // loop_header
    %s9 = sphi 0, %s13
    %p10 = scmp.ge.s32.totalorder %s9, 8
    %s16 = sphi 0, %s28
    %s17 = sphi 0, %s24
    %s18 = sphi 0, %s16
    %s19 = sphi 0, %s17
    %s20 = sphi 0, %s18
    %s21 = sphi 0, %s19
    %s33 = sphi 0, %s35
    %s36 = sphi 0, %s33
    %s37 = sphi 0, %s36
    %s53 = sphi 0, %s37
    %s57 = sphi 0, %s57
    %s59 = sphi 0, %s57
    %s60 = sphi 0, %s59
    %s74 = sphi 0, %s60
    %s78 = sphi 0, %s78
    %s80 = sphi 0, %s78
    %s81 = sphi 0, %s80
    %s95 = sphi 0, %s81
    %s103 = sphi 0, %s105
    %s106 = sphi 0, %s103
    %s107 = sphi 0, %s106
    %s123 = sphi 0, %s107
  $region4: #{tpu_custom_call.1} parent=0 // loop_header_branch
    %12 = sbr.rel (%p10) target = $region8
  $region5: #{tpu_custom_call.1} parent=0 // loop_body
    %s14 = ssub.s32 %s9, 1
    %s15 = ssub.s32 %s9, 2
    %s22 = sadd.s32 1, %s17
    %p23 = scmp.ge.s32.totalorder %s22, 3
    %s24 = scalar_select %p23, 0, %s22
    %s25 = sadd.s32 1, %s16
    %s26 = scalar_select %p23, %s25, %s16
    %p27 = scmp.ge.s32.totalorder %s26, 2
    %s28 = scalar_select %p27, 0, %s26
    %s29 = ssub.s32 %s16, %s28
    %s30 = ssub.s32 %s17, %s24
    %s31 = sor.u32 %s29, %s30
    %p32 = scmp.eq.s32.totalorder %s31, 0
    %s34 = sadd.s32 %s33, 1
    %s35 = scalar_select %p32, %s33, %s34
    %p38 = pneg %p32
    %p39 = scmp.eq.s32.totalorder %s9, 5
    %p40 = por %p38, %p39
    %p41 = scmp.ne.s32.totalorder %s33, %s36
    %p42 = scmp.eq.s32.totalorder %s9, 0
    %p43 = por %p41, %p42
    %p44 = scmp.ne.s32.totalorder %s33, %s36
    %p45 = scmp.eq.s32.totalorder %s14, 5
    %p46 = por %p44, %p45
    %p47 = scmp.ne.s32.totalorder %s36, %s37
    %p48 = scmp.eq.s32.totalorder %s14, 0
    %p49 = por %p47, %p48
    %p50 = scmp.ne.s32.totalorder %s36, %s37
    %p51 = scmp.eq.s32.totalorder %s15, 5
    %p52 = por %p50, %p51
    %p54 = scmp.ne.s32.totalorder %s37, %s53
    %p55 = scmp.eq.s32.totalorder %s15, 0
    %p56 = por %p54, %p55
    %s58 = sadd.s32 %s57, 1
    %p61 = scmp.eq.s32.totalorder %s9, 5
    %p62 = scmp.ne.s32.totalorder %s57, %s59
    %p63 = scmp.eq.s32.totalorder %s9, 0
    %p64 = por %p62, %p63
    %p65 = scmp.ne.s32.totalorder %s57, %s59
    %p66 = scmp.eq.s32.totalorder %s14, 5
    %p67 = por %p65, %p66
    %p68 = scmp.ne.s32.totalorder %s59, %s60
    %p69 = scmp.eq.s32.totalorder %s14, 0
    %p70 = por %p68, %p69
    %p71 = scmp.ne.s32.totalorder %s59, %s60
    %p72 = scmp.eq.s32.totalorder %s15, 5
    %p73 = por %p71, %p72
    %p75 = scmp.ne.s32.totalorder %s60, %s74
    %p76 = scmp.eq.s32.totalorder %s15, 0
    %p77 = por %p75, %p76
    %s79 = sadd.s32 %s78, 1
    %p82 = scmp.eq.s32.totalorder %s9, 5
    %p83 = scmp.ne.s32.totalorder %s78, %s80
    %p84 = scmp.eq.s32.totalorder %s9, 0
    %p85 = por %p83, %p84
    %p86 = scmp.ne.s32.totalorder %s78, %s80
    %p87 = scmp.eq.s32.totalorder %s14, 5
    %p88 = por %p86, %p87
    %p89 = scmp.ne.s32.totalorder %s80, %s81
    %p90 = scmp.eq.s32.totalorder %s14, 0
    %p91 = por %p89, %p90
    %p92 = scmp.ne.s32.totalorder %s80, %s81
    %p93 = scmp.eq.s32.totalorder %s15, 5
    %p94 = por %p92, %p93
    %p96 = scmp.ne.s32.totalorder %s81, %s95
    %p97 = scmp.eq.s32.totalorder %s15, 0
    %p98 = por %p96, %p97
    %s99 = ssub.s32 %s16, %s28
    %s100 = ssub.s32 %s17, %s24
    %s101 = sor.u32 %s99, %s100
    %p102 = scmp.eq.s32.totalorder %s101, 0
    %s104 = sadd.s32 %s103, 1
    %s105 = scalar_select %p102, %s103, %s104
    %p108 = pneg %p102
    %p109 = scmp.eq.s32.totalorder %s9, 5
    %p110 = por %p108, %p109
    %p111 = scmp.ne.s32.totalorder %s103, %s106
    %p112 = scmp.eq.s32.totalorder %s9, 0
    %p113 = por %p111, %p112
    %p114 = scmp.ne.s32.totalorder %s103, %s106
    %p115 = scmp.eq.s32.totalorder %s14, 5
    %p116 = por %p114, %p115
    %p117 = scmp.ne.s32.totalorder %s106, %s107
    %p118 = scmp.eq.s32.totalorder %s14, 0
    %p119 = por %p117, %p118
    %p120 = scmp.ne.s32.totalorder %s106, %s107
    %p121 = scmp.eq.s32.totalorder %s15, 5
    %p122 = por %p120, %p121
    %p124 = scmp.ne.s32.totalorder %s107, %s123
    %p125 = scmp.eq.s32.totalorder %s15, 0
    %p126 = por %p124, %p125
    %p127 = scmp.le.s32.totalorder 1, %s9
    %p128 = scmp.lt.s32.totalorder %s9, 7
    %p129 = pnand %p127, %p128
    %p130 = pneg %p129
    // Predicated region
    $region9: #{tpu_custom_call.1} parent=5 // pred_check
      _
    $region10: #{tpu_custom_call.1} parent=5 // pred_check_branch
      %132 = sbr.rel (%p129) target = $region12
    $region11: #{tpu_custom_call.1} parent=5 // pred_region
      %s133 = ssub.s32 %s9, 1
      // Predicated region
      $region13: #{tpu_custom_call.1} parent=11 // pred_check
        %p134 = pneg %p70
      $region14: #{tpu_custom_call.1} parent=11 // pred_check_branch
        %136 = sbr.rel (%p134) target = $region16
      $region15: #{tpu_custom_call.1} parent=11 // pred_region
        _
      $region16: #{tpu_custom_call.1} parent=11 // pred_fallthru
        _
      // Predicated region
      $region17: #{tpu_custom_call.1} parent=11 // pred_check
        %p137 = pneg %p91
      $region18: #{tpu_custom_call.1} parent=11 // pred_check_branch
        %139 = sbr.rel (%p137) target = $region20
      $region19: #{tpu_custom_call.1} parent=11 // pred_region
        _
      $region20: #{tpu_custom_call.1} parent=11 // pred_fallthru
        _
    $region12: #{tpu_custom_call.1} parent=5 // pred_fallthru
      _
    %p140 = scmp.lt.s32.totalorder %s9, 6
    // Predicated region
    $region21: #{tpu_custom_call.1} parent=5 // pred_check
      %p141 = pneg %p140
    $region22: #{tpu_custom_call.1} parent=5 // pred_check_branch
      %143 = sbr.rel (%p141) target = $region24
    $region23: #{tpu_custom_call.1} parent=5 // pred_region
      // Predicated region
      $region25: #{tpu_custom_call.1} parent=23 // pred_check
        %p144 = pneg %p43
      $region26: #{tpu_custom_call.1} parent=23 // pred_check_branch
        %146 = sbr.rel (%p144) target = $region28
      $region27: #{tpu_custom_call.1} parent=23 // pred_region
        %s147 = smul.u32 6, %s17
        %p148 = scmp.lt.s32.totalorder %s16, 1
        %s149 = scalar_select %p148, %s16, 1
        %p150 = scmp.lt.s32.totalorder %s147, 17
        %s151 = scalar_select %p150, %s147, 17
        %s152 = smul.addr %s149, 18
        %s153 = sadd.s32 %s151, %s152
        %s154 = smul.addr %s153, 4
        %s155 = scalar_lea.vmem %s0, %s154
        %s156 = smul.u32 6, %s17
      $region28: #{tpu_custom_call.1} parent=23 // pred_fallthru
        _
    $region24: #{tpu_custom_call.1} parent=5 // pred_fallthru
      _
    %p157 = scmp.le.s32.totalorder 1, %s9
    %p158 = scmp.lt.s32.totalorder %s9, 7
    %p159 = pnand %p157, %p158
    %p160 = pneg %p159
    // Predicated region
    $region29: #{tpu_custom_call.1} parent=5 // pred_check
      _
    $region30: #{tpu_custom_call.1} parent=5 // pred_check_branch
      %162 = sbr.rel (%p159) target = $region32
    $region31: #{tpu_custom_call.1} parent=5 // pred_region
      %s163 = ssub.s32 %s9, 1
      %s164 = smul.u32 6, %s19
      %p165 = scmp.lt.s32.totalorder %s18, 1
      %s166 = scalar_select %p165, %s18, 1
      %p167 = scmp.lt.s32.totalorder %s164, 17
      %s168 = scalar_select %p167, %s164, 17
      %s169 = smul.addr %s166, 18
      %s170 = sadd.s32 %s168, %s169
      %s171 = smul.addr %s170, 4
      %s172 = scalar_lea.vmem %s0, %s171
      %p173 = pneg %p49
      %p174 = pneg %p46
      %p175 = pneg %p70
      %p176 = pneg %p67
      %p177 = pneg %p91
      %p178 = pneg %p88
      %p179 = pneg %p119
      %p180 = pneg %p116
      %p181 = scmp.lt.s32.totalorder %s18, 1
      %s182 = scalar_select %p181, %s18, 1
      %p183 = scmp.lt.s32.totalorder %s19, 2
      %s184 = scalar_select %p183, %s19, 2
      %s185 = smul.addr %s182, 3
      %s186 = sadd.s32 %s184, %s185
      %s187 = smul.addr %s186, 4
      %s188 = scalar_lea.vmem %s3, %s187
      %s189 = smul.u32 6, %s19
      %p190 = scmp.lt.s32.totalorder %s18, 1
      %s191 = scalar_select %p190, %s18, 1
      %p192 = scmp.lt.s32.totalorder %s189, 17
      %s193 = scalar_select %p192, %s189, 17
      %s194 = smul.addr %s191, 18
      %s195 = sadd.s32 %s193, %s194
      %s196 = smul.addr %s195, 4
      %s197 = scalar_lea.vmem %s0, %s196
      %s198 = smul.u32 6, %s19
      %p199 = scmp.lt.s32.totalorder %s18, 1
      %s200 = scalar_select %p199, %s18, 1
      %p201 = scmp.lt.s32.totalorder %s19, 2
      %s202 = scalar_select %p201, %s19, 2
      %s203 = smul.addr %s200, 3
      %s204 = sadd.s32 %s202, %s203
      %s205 = smul.addr %s204, 4
      %s206 = scalar_lea.vmem %s3, %s205
      %v208 = vld [vmem:[%s197] sm:$0xf]
      %v209 = vld [vmem:[%s197 + $0x4] sm:$0xf]
      %v210 = vld [vmem:[%s197 + $0x8] sm:$0xf]
      %v211 = vld [vmem:[%s197 + $0xc] sm:$0xf]
      %v212 = vld [vmem:[%s197 + $0x10] sm:$0xf]
      %v213 = vld [vmem:[%s197 + $0x14] sm:$0xf]
      %v214 = vld [vmem:[%s1] sm:$0xf]
      %v215 = vld [vmem:[%s1 + $0x4] sm:$0xf]
      %v222 = vunpack.c.l.b16 %v208
      %v223 = vunpack.c.l.b16 %v209
      %v224 = vunpack.c.l.b16 %v210
      %v225 = vunpack.c.l.b16 %v211
      %v226 = vunpack.c.l.b16 %v212
      %v227 = vunpack.c.l.b16 %v213
      %v228 = vpack.c.b16 %v223, %v222
      %v229 = vpack.c.b16 %v225, %v224
      %v230 = vpack.c.b16 %v227, %v226
      %v233 = vunpack.c.l.b16 %v214
      %v234 = vunpack.c.l.b16 %v215
      %v235 = vpack.c.b16 %v234, %v233
      %vm237 = vcmask 130048
      %v239 = vsel %vm237, %v228, 0
      %v242 = vsel %vm237, %v229, 0
      %v245 = vsel %vm237, %v230, 0
      %247 = vmatprep.subr.bf16.mxu0 0
      %248 = vmatpush1.bf16.msra.mxu0 %v235
      %249 = vmatprep.subr.bf16.mxu0 0
      %250 = vmatpush1.bf16.msra.mxu0 0
      %251 = vmatprep.subr.bf16.mxu0 0
      %252 = vmatpush1.bf16.msra.mxu0 0
      %253 = vmatprep.subr.bf16.mxu0 0
      %254 = vmatpush1.bf16.msra.mxu0 0
      %255 = vmatprep.subr.bf16.mxu0 0
      %256 = vmatpush1.bf16.msra.mxu0 0
      %257 = vmatprep.subr.bf16.mxu0 0
      %258 = vmatpush1.bf16.msra.mxu0 0
      %259 = vmatprep.subr.bf16.mxu0 0
      %260 = vmatpush1.bf16.msra.mxu0 0
      %261 = vmatprep.subr.bf16.mxu0 0
      %262 = vmatpush1.bf16.msra.mxu0 0
      %263 = vmatprep.subr.bf16.mxu0 0
      %264 = vmatpush1.bf16.msra.mxu0 0
      %265 = vmatprep.subr.bf16.mxu0 0
      %266 = vmatpush1.bf16.msra.mxu0 0
      %267 = vmatprep.subr.bf16.mxu0 0
      %268 = vmatpush1.bf16.msra.mxu0 0
      %269 = vmatprep.subr.bf16.mxu0 0
      %270 = vmatpush1.bf16.msra.mxu0 0
      %271 = vmatprep.subr.bf16.mxu0 0
      %272 = vmatpush1.bf16.msra.mxu0 0
      %273 = vmatprep.subr.bf16.mxu0 0
      %274 = vmatpush1.bf16.msra.mxu0 0
      %275 = vmatprep.subr.bf16.mxu0 0
      %276 = vmatpush1.bf16.msra.mxu0 0
      %277 = vmatprep.subr.bf16.mxu0 0
      %278 = vmatpush1.bf16.msra.mxu0 0
      %279 = vmatprep.mubr.bf16.mxu0 0
      %280 = vmatmul.mubr.bf16.gmra.mrb[0].mxu0 %v239
      %v281 = vpop.f32.mrb[0].mxu0
      %v282 = vadd.f32 0.0, %v281
      %v283 = vpop.f32.mrb[0].mxu0
      %v284 = vpop.f32.mrb[0].mxu0
      %v285 = vadd.f32 0.0, %v284
      %v286 = vpop.f32.mrb[0].mxu0
      %287 = vmatprep.mubr.bf16.mxu0 0
      %288 = vmatmul.mubr.bf16.gmra.mrb[0].mxu0 %v242
      %v289 = vpop.f32.mrb[0].mxu0
      %v290 = vadd.f32 0.0, %v289
      %v291 = vpop.f32.mrb[0].mxu0
      %v292 = vpop.f32.mrb[0].mxu0
      %v293 = vadd.f32 0.0, %v292
      %v294 = vpop.f32.mrb[0].mxu0
      %295 = vmatprep.mubr.bf16.mxu0 0
      %296 = vmatmul.mubr.bf16.gmra.mrb[0].mxu0 %v245
      %v297 = vpop.f32.mrb[0].mxu0
      %v298 = vadd.f32 0.0, %v297
      %v299 = vpop.f32.mrb[0].mxu0
      %v300 = vpop.f32.mrb[0].mxu0
      %v301 = vadd.f32 0.0, %v300
      %v302 = vpop.f32.mrb[0].mxu0
      %303 = vdwg.mxu0
      %v310 = vcombine.high %v282, %v282
      %v311 = vcombine.high %v285, %v285
      %v312 = vcombine.high %v290, %v290
      %v313 = vcombine.high %v293, %v293
      %v314 = vcombine.high %v298, %v298
      %v315 = vcombine.high %v301, %v301
      %vm322 = vcmask 257024
      %v323 = vsel %vm322, %v282, -inf
      %v324 = vsel %vm322, %v311, -inf
      %v325 = vsel %vm322, %v293, -inf
      %v326 = vmax.f32 %v323, %v325
      %v327 = vsel %vm322, %v314, -inf
      %v328 = vmax.f32 %v324, %v327
      %v329 = vmax.f32 %v326, %v328
      %v330 = vsel %vm322, %v310, -inf
      %v331 = vsel %vm322, %v290, -inf
      %v332 = vsel %vm322, %v313, -inf
      %v333 = vmax.f32 %v330, %v332
      %v334 = vsel %vm322, %v301, -inf
      %v335 = vmax.f32 %v331, %v334
      %v336 = vmax.f32 %v333, %v335
      %v337 = vsel %vm322, %v285, -inf
      %v338 = vsel %vm322, %v312, -inf
      %v339 = vsel %vm322, %v298, -inf
      %v340 = vmax.f32 %v337, %v339
      %v341 = vsel %vm322, %v315, -inf
      %v342 = vmax.f32 %v338, %v341
      %v343 = vmax.f32 %v340, %v342
      %v344 = vsel %vm322, %v329, -inf
      %v345 = vrot.slane %v344, 4
      %v346 = vmax.f32 %v344, %v345
      %v347 = vrot.slane %v346, 2
      %v348 = vmax.f32 %v346, %v347
      %v349 = vrot.slane %v348, 1
      %v350 = vmax.f32 %v348, %v349
      %v351 = vld [vmem:[%s2] sm:$0x1]
      %v352 = vadd.f32 %v350, %v351
      %vm353 = vcmask 253952
      %354 = vst.msk [vmem:[%s206] sm:$0x1] %vm353, %v352
      %v355 = vsel %vm322, %v336, -inf
      %v356 = vrot.slane %v355, 4
      %v357 = vmax.f32 %v355, %v356
      %v358 = vrot.slane %v357, 2
      %v359 = vmax.f32 %v357, %v358
      %v360 = vrot.slane %v359, 1
      %v361 = vmax.f32 %v359, %v360
      %v362 = vld [vmem:[%s2] sm:$0x1]
      %v363 = vadd.f32 %v361, %v362
      %364 = vst.msk [vmem:[%s206 + $0x1] sm:$0x1] %vm353, %v363
      %v365 = vsel %vm322, %v343, -inf
      %v366 = vrot.slane %v365, 4
      %v367 = vmax.f32 %v365, %v366
      %v368 = vrot.slane %v367, 2
      %v369 = vmax.f32 %v367, %v368
      %v370 = vrot.slane %v369, 1
      %v371 = vmax.f32 %v369, %v370
      %v372 = vld [vmem:[%s2] sm:$0x1]
      %v373 = vadd.f32 %v371, %v372
      %374 = vst.msk [vmem:[%s206 + $0x2] sm:$0x1] %vm353, %v373
      %p375 = scmp.lt.s32.totalorder %s18, 1
      %s376 = scalar_select %p375, %s18, 1
      %p377 = scmp.lt.s32.totalorder %s19, 2
      %s378 = scalar_select %p377, %s19, 2
      %s379 = smul.addr %s376, 3
      %s380 = sadd.s32 %s378, %s379
      %s381 = smul.addr %s380, 4
      %s382 = scalar_lea.vmem %s3, %s381
      // Predicated region
      $region33: #{tpu_custom_call.1} parent=31 // pred_check
        %p383 = pneg %p116
      $region34: #{tpu_custom_call.1} parent=31 // pred_check_branch
        %385 = sbr.rel (%p383) target = $region36
      $region35: #{tpu_custom_call.1} parent=31 // pred_region
        _
      $region36: #{tpu_custom_call.1} parent=31 // pred_fallthru
        _
    $region32: #{tpu_custom_call.1} parent=5 // pred_fallthru
      _
    %p386 = scmp.le.s32.totalorder 2, %s9
    // Predicated region
    $region37: #{tpu_custom_call.1} parent=5 // pred_check
      %p387 = pneg %p386
    $region38: #{tpu_custom_call.1} parent=5 // pred_check_branch
      %389 = sbr.rel (%p387) target = $region40
    $region39: #{tpu_custom_call.1} parent=5 // pred_region
      %s390 = ssub.s32 %s9, 2
      // Predicated region
      $region41: #{tpu_custom_call.1} parent=39 // pred_check
        %p391 = pneg %p122
      $region42: #{tpu_custom_call.1} parent=39 // pred_check_branch
        %393 = sbr.rel (%p391) target = $region44
      $region43: #{tpu_custom_call.1} parent=39 // pred_region
        %p394 = scmp.lt.s32.totalorder %s20, 1
        %s395 = scalar_select %p394, %s20, 1
        %p396 = scmp.lt.s32.totalorder %s21, 2
        %s397 = scalar_select %p396, %s21, 2
        %s398 = smul.addr %s395, 3
        %s399 = sadd.s32 %s397, %s398
        %s400 = smul.addr %s399, 4
        %s401 = scalar_lea.vmem %s3, %s400
      $region44: #{tpu_custom_call.1} parent=39 // pred_fallthru
        _
    $region40: #{tpu_custom_call.1} parent=5 // pred_fallthru
      _
  $region6: #{tpu_custom_call.1} parent=0 // loop_footer
    %s13 = sadd.s32 1, %s9
  $region7: #{tpu_custom_call.1} parent=0 // loop_footer_branch
    %8 = sbr.rel target = $region3
  $region8: #{tpu_custom_call.1} parent=0 // loop_exit
    _

</llo_original>
